<compile_context>
chip_gen: v7x
topology: tpu7x:2x2x1
jax: 0.10.0
libtpu: 0.0.40
codegen_flags: <defaults>
</compile_context>

<pallas_src>
import functools

import jax
import jax.numpy as jnp
from jax.experimental import pallas as pl
from jax.experimental.pallas import tpu as pltpu


# -----------------------------------------------------------------------------
# Pallas kernel: fused MLP forward (one batch tile per grid step)
# -----------------------------------------------------------------------------
def _saplma_kernel(x_ref,
                   w1_ref, b1_ref,
                   w2_ref, b2_ref,
                   w3_ref, b3_ref,
                   w4_ref, b4_ref,
                   o_ref):
    # Layer 1: (TB, D) @ (D, 256) + (1, 256) -> ReLU   (bf16 operands, f32 acc)
    h = jnp.dot(x_ref[...].astype(jnp.bfloat16), w1_ref[...],
                preferred_element_type=jnp.float32)
    h = jnp.maximum(h + b1_ref[...], 0.0)

    # Layer 2: (TB, 256) @ (256, 128) + (1, 128) -> ReLU
    h = jnp.dot(h.astype(jnp.bfloat16), w2_ref[...],
                preferred_element_type=jnp.float32)
    h = jnp.maximum(h + b2_ref[...], 0.0)

    # Layer 3: (TB, 128) @ (128, 64) + (1, 64) -> ReLU
    h = jnp.dot(h.astype(jnp.bfloat16), w3_ref[...],
                preferred_element_type=jnp.float32)
    h = jnp.maximum(h + b3_ref[...], 0.0)

    # Layer 4 (64 -> 1), computed transposed so the output block is lane-dense
    # (1, TB): z^T = W4_pad(8,64) @ h^T(64,TB); only row 0 of W4_pad is real.
    zt = jax.lax.dot_general(w4_ref[...], h,
                             dimension_numbers=(((1,), (1,)), ((), ())),
                             preferred_element_type=jnp.float32)   # (8, TB)
    z = zt[0:1, :] + b4_ref[...]                                    # (1, TB)

    # Sigmoid: exp lands on the EUP; exact divide keeps outputs in [0, 1].
    o_ref[...] = (1.0 / (1.0 + jnp.exp(-z))).astype(o_ref.dtype)


# -----------------------------------------------------------------------------
# Tiling / VMEM sizing helpers
# -----------------------------------------------------------------------------
def _round_up(n, m):
    return ((n + m - 1) // m) * m


def _device_vmem_budget():
    """Generation-aware usable-VMEM budget (bytes)."""
    kind = ""
    try:
        kind = jax.devices()[0].device_kind.lower()
    except Exception:
        pass
    if "v7" in kind:
        return 48 * 1024 * 1024      # v7x: 64 MiB physical per TensorCore
    if "v5" in kind or "v6" in kind:
        return 96 * 1024 * 1024      # v5e / v6e: 128 MiB physical
    return 24 * 1024 * 1024          # conservative default for older parts


def _choose_tile(B, D, x_itemsize, resident_param_bytes, tile_b, vmem_budget):
    """Pick (tb, Bp).

    Constraints:
      * x block (tb, D): tb % 8 == 0.
      * lane-dense output block (1, tb): tb % 128 == 0 unless tb == Bp.
    Sizing: double-buffered x tile + double-buffered (1, tb) f32 output
    + double-buffered resident params should fit ~70% of the VMEM budget,
    and keep >= 2 grid steps when possible so ("parallel",) can use both
    v7x TensorCores.
    """
    tile_b = max(8, _round_up(int(tile_b), 8))
    B8 = _round_up(B, 8)

    usable = int(0.7 * vmem_budget) - resident_param_bytes
    per_row = 2 * D * x_itemsize + 2 * 4       # x double-buffer + out double-buffer
    tb_cap = max(128, (max(usable, 0) // per_row) // 128 * 128)

    if B8 < 256 and B8 <= tile_b and B8 <= tb_cap:
        # Tiny batch: single grid step, blocks equal the full (padded) arrays.
        return B8, B8

    Bp128 = _round_up(B, 128)
    tb = min(_round_up(tile_b, 128),
             tb_cap,
             max(128, (Bp128 // 2) // 128 * 128))   # aim for >= 2 grid steps
    return tb, _round_up(B, tb)


# -----------------------------------------------------------------------------
# Wrapper
# -----------------------------------------------------------------------------
@functools.partial(jax.jit, static_argnames=("tile_b",))
def saplma_forward(x, params, *, tile_b=1024):
    """Fused Bayesian-SAPLMA MLP forward on TPU via Pallas.

    x:       (B, input_size) float32 or bfloat16 (bf16 halves the HBM stream
             for large-D probes; the kernel uses bf16 MXU operands either way)
    params:  dict of sampled weights/biases (float32):
             w1 (D,256) b1 (1,256)  w2 (256,128) b2 (1,128)
             w3 (128,64) b3 (1,64)  w4 (64,1)    b4 (1,1)
    returns: (B, 1) float32 in [0, 1]
    """
    B, D = x.shape
    x_itemsize = jnp.dtype(x.dtype).itemsize

    # bf16 weights for the three MXU matmuls (halves weight DMA bytes);
    # biases and the tiny final layer stay f32. w4 is passed transposed and
    # zero-padded to 8 rows so the final matmul is sublane-aligned.
    w1 = params["w1"].astype(jnp.bfloat16)
    w2 = params["w2"].astype(jnp.bfloat16)
    w3 = params["w3"].astype(jnp.bfloat16)
    b1 = params["b1"].astype(jnp.float32)
    b2 = params["b2"].astype(jnp.float32)
    b3 = params["b3"].astype(jnp.float32)
    w4t = params["w4"].reshape(1, -1).astype(jnp.float32)           # (1, 64)
    w4p = jnp.zeros((8, w4t.shape[1]), jnp.float32).at[0:1, :].set(w4t)
    b4 = params["b4"].reshape(1, 1).astype(jnp.float32)             # (1, 1)

    # Resident params get double-buffered VMEM allocations by default.
    resident_param_bytes = 2 * int(
        (w1.size + w2.size + w3.size) * 2
        + (b1.size + b2.size + b3.size + w4p.size + b4.size) * 4)

    budget = _device_vmem_budget()
    tb, Bp = _choose_tile(B, D, x_itemsize, resident_param_bytes, tile_b, budget)
    x_p = jnp.pad(x, ((0, Bp - B), (0, 0))) if Bp != B else x
    grid = (Bp // tb,)

    # Only raise the scoped-VMEM limit when we actually need more than the
    # default (16/32 MiB); keeps tiny-D runs safe on every TPU generation.
    footprint = (2 * tb * D * x_itemsize + 2 * tb * 4
                 + resident_param_bytes + (1 << 20))
    cp_kwargs = dict(dimension_semantics=("parallel",))
    if footprint > 12 * 1024 * 1024:
        cp_kwargs["vmem_limit_bytes"] = int(min(budget, footprint * 3 // 2))

    # x / output stream over the batch grid; weights & biases stay resident
    # (constant index_map -> no re-DMA per grid step).
    in_specs = [
        pl.BlockSpec((tb, D), lambda i: (i, 0)),              # x tile
        pl.BlockSpec(w1.shape, lambda i: (0, 0)),             # w1
        pl.BlockSpec(b1.shape, lambda i: (0, 0)),             # b1
        pl.BlockSpec(w2.shape, lambda i: (0, 0)),             # w2
        pl.BlockSpec(b2.shape, lambda i: (0, 0)),             # b2
        pl.BlockSpec(w3.shape, lambda i: (0, 0)),             # w3
        pl.BlockSpec(b3.shape, lambda i: (0, 0)),             # b3
        pl.BlockSpec(w4p.shape, lambda i: (0, 0)),            # w4 (padded, T)
        pl.BlockSpec(b4.shape, lambda i: (0, 0)),             # b4
    ]
    # Lane-dense output: (1, Bp) row, (1, tb) blocks -> unmasked stores.
    out_spec = pl.BlockSpec((1, tb), lambda i: (0, i))

    flops = 2 * Bp * (D * 256 + 256 * 128 + 128 * 64 + 8 * 64)
    bytes_accessed = int(
        Bp * D * x_itemsize
        + (w1.size + w2.size + w3.size) * 2
        + (b1.size + b2.size + b3.size + w4p.size + b4.size) * 4
        + Bp * 4)
    cost = pl.CostEstimate(flops=flops, transcendentals=2 * Bp,
                           bytes_accessed=bytes_accessed)

    out = pl.pallas_call(
        _saplma_kernel,
        out_shape=jax.ShapeDtypeStruct((1, Bp), jnp.float32),
        grid=grid,
        in_specs=in_specs,
        out_specs=out_spec,
        compiler_params=pltpu.CompilerParams(**cp_kwargs),
        cost_estimate=cost,
    )(x_p, w1, b1, w2, b2, w3, b3, w4p, b4)

    # Back to the module's (B, 1) layout (free reshape/slice in the wrapper).
    return out[0, :B][:, None]


# -----------------------------------------------------------------------------
# Deterministic Bayesian parameter construction + weight sampling (plain JAX)
# -----------------------------------------------------------------------------
def _init_bayesian_linear(key, fan_in, fan_out):
    """Create mu / rho for weight and bias (blitz-style defaults)."""
    k_wmu, k_bmu = jax.random.split(key)
    w_mu = 0.1 * jax.random.normal(k_wmu, (fan_in, fan_out), dtype=jnp.float32)
    b_mu = 0.1 * jax.random.normal(k_bmu, (1, fan_out), dtype=jnp.float32)
    w_rho = jnp.full((fan_in, fan_out), -5.0, dtype=jnp.float32)
    b_rho = jnp.full((1, fan_out), -5.0, dtype=jnp.float32)
    return dict(w_mu=w_mu, w_rho=w_rho, b_mu=b_mu, b_rho=b_rho)


def _sample_layer(key, layer):
    """Reparameterization-trick sample: theta = mu + softplus(rho) * eps."""
    k_w, k_b = jax.random.split(key)
    w_sigma = jnp.log1p(jnp.exp(layer["w_rho"]))
    b_sigma = jnp.log1p(jnp.exp(layer["b_rho"]))
    w = layer["w_mu"] + w_sigma * jax.random.normal(k_w, layer["w_mu"].shape)
    b = layer["b_mu"] + b_sigma * jax.random.normal(k_b, layer["b_mu"].shape)
    return w, b


def build_sampled_params(key, input_size):
    sizes = [(input_size, 256), (256, 128), (128, 64), (64, 1)]
    keys = jax.random.split(key, 2 * len(sizes))
    params = {}
    for i, (fi, fo) in enumerate(sizes):
        layer = _init_bayesian_linear(keys[2 * i], fi, fo)
        w, b = _sample_layer(keys[2 * i + 1], layer)
        params[f"w{i + 1}"] = w
        params[f"b{i + 1}"] = b
    return params
# TODO(synk): blitz's @variational_estimator adds KL/ELBO training utilities
# (sample_elbo etc.); only the sampled-weight forward pass is implemented here.


# -----------------------------------------------------------------------------
# Pure-JAX references
# -----------------------------------------------------------------------------
def saplma_reference_bf16(x, p):
    """Mirrors the kernel math (bf16 matmul operands, f32 accumulation)."""
    def dot(a, w):
        return jnp.dot(a.astype(jnp.bfloat16), w.astype(jnp.bfloat16),
                       preferred_element_type=jnp.float32)
    h = jnp.maximum(dot(x, p["w1"]) + p["b1"], 0.0)
    h = jnp.maximum(dot(h, p["w2"]) + p["b2"], 0.0)
    h = jnp.maximum(dot(h, p["w3"]) + p["b3"], 0.0)
    z = jnp.sum(h * p["w4"].reshape(1, -1), axis=-1, keepdims=True) + p["b4"]
    return jax.nn.sigmoid(z)


def saplma_reference_f32(x, p):
    x = x.astype(jnp.float32)
    h = jnp.maximum(x @ p["w1"] + p["b1"], 0.0)
    h = jnp.maximum(h @ p["w2"] + p["b2"], 0.0)
    h = jnp.maximum(h @ p["w3"] + p["b3"], 0.0)
    z = h @ p["w4"] + p["b4"]
    return jax.nn.sigmoid(z)


if __name__ == "__main__":
    key = jax.random.PRNGKey(0)
    k_x, k_p, k_x2 = jax.random.split(key, 3)

    input_size = 32  # hidden-state size fed to the SAPLMA probe
    params = build_sampled_params(k_p, input_size)

    # Small batch: single grid step, full-array blocks.
    batch = 8
    x = jax.random.normal(k_x, (batch, input_size), dtype=jnp.float32)
    out = jax.block_until_ready(saplma_forward(x, params))
    assert out.shape == (batch, 1), out.shape
    assert jnp.allclose(out, saplma_reference_bf16(x, params),
                        atol=2e-3, rtol=2e-3)
    assert jnp.allclose(out, saplma_reference_f32(x, params), atol=2e-2)
    assert jnp.all(out >= 0.0) and jnp.all(out <= 1.0)

    # Non-multiple batch with a small tile: exercises the batch grid (3 steps),
    # edge padding, weight residency, and the lane-dense (1, tb) output blocks.
    batch2 = 272
    x2 = jax.random.normal(k_x2, (batch2, input_size), dtype=jnp.float32)
    out2 = jax.block_until_ready(saplma_forward(x2, params, tile_b=128))
    assert out2.shape == (batch2, 1), out2.shape
    assert jnp.allclose(out2, saplma_reference_bf16(x2, params),
                        atol=2e-3, rtol=2e-3)

    # bf16 activation stream (halves the x HBM bytes for large-D probes).
    out2_bf16 = jax.block_until_ready(
        saplma_forward(x2.astype(jnp.bfloat16), params, tile_b=128))
    assert out2_bf16.shape == (batch2, 1), out2_bf16.shape
    assert jnp.allclose(out2_bf16, saplma_reference_f32(x2, params), atol=3e-2)

    print("KERNEL_OK")
</pallas_src>

<mosaic_0001>
module attributes {stable_mosaic.version = 11 : i64} {
  func.func @_saplma_kernel(%arg0: i32, %arg1: memref<8x32xf32, #tpu.memory_space<vmem>>, %arg2: memref<32x256xbf16, #tpu.memory_space<vmem>>, %arg3: memref<1x256xf32, #tpu.memory_space<vmem>>, %arg4: memref<256x128xbf16, #tpu.memory_space<vmem>>, %arg5: memref<1x128xf32, #tpu.memory_space<vmem>>, %arg6: memref<128x64xbf16, #tpu.memory_space<vmem>>, %arg7: memref<1x64xf32, #tpu.memory_space<vmem>>, %arg8: memref<8x64xf32, #tpu.memory_space<vmem>>, %arg9: memref<1x1xf32, #tpu.memory_space<vmem>>, %arg10: memref<1x8xf32, #tpu.memory_space<vmem>>) attributes {dimension_semantics = [#tpu.dimension_semantics<parallel>], iteration_bounds = array<i64: 1>, scalar_prefetch = 0 : i64, scratch_operands = 0 : i64, tpu.core_type = #tpu.core_type<tc>, window_params = [{transform_indices = @transform_0, window_bounds = array<i64: 8, 32>}, {pipeline_mode = #tpu.pipeline_mode<synchronous>, transform_indices = @transform_1, window_bounds = array<i64: 32, 256>}, {pipeline_mode = #tpu.pipeline_mode<synchronous>, transform_indices = @transform_2, window_bounds = array<i64: 1, 256>}, {pipeline_mode = #tpu.pipeline_mode<synchronous>, transform_indices = @transform_3, window_bounds = array<i64: 256, 128>}, {pipeline_mode = #tpu.pipeline_mode<synchronous>, transform_indices = @transform_4, window_bounds = array<i64: 1, 128>}, {pipeline_mode = #tpu.pipeline_mode<synchronous>, transform_indices = @transform_5, window_bounds = array<i64: 128, 64>}, {pipeline_mode = #tpu.pipeline_mode<synchronous>, transform_indices = @transform_6, window_bounds = array<i64: 1, 64>}, {pipeline_mode = #tpu.pipeline_mode<synchronous>, transform_indices = @transform_7, window_bounds = array<i64: 8, 64>}, {pipeline_mode = #tpu.pipeline_mode<synchronous>, transform_indices = @transform_8, window_bounds = array<i64: 1, 1>}, {transform_indices = @transform_9, window_bounds = array<i64: 1, 8>}]} {
    %c0 = arith.constant 0 : index
    %c0_0 = arith.constant 0 : index
    %0 = vector.load %arg1[%c0, %c0_0] : memref<8x32xf32, #tpu.memory_space<vmem>>, vector<8x32xf32>
    %1 = arith.truncf %0 : vector<8x32xf32> to vector<8x32xbf16>
    %c0_1 = arith.constant 0 : index
    %c0_2 = arith.constant 0 : index
    %2 = vector.load %arg2[%c0_1, %c0_2] : memref<32x256xbf16, #tpu.memory_space<vmem>>, vector<32x256xbf16>
    %cst = arith.constant dense<0.000000e+00> : vector<8x256xf32>
    %3 = tpu.matmul %1, %2, %cst {dimension_numbers = #tpu.dot_dimension_numbers<[1], [0], [0], [1], [0, 0, 1, 1], [], []>} : vector<8x32xbf16>, vector<32x256xbf16>, vector<8x256xf32> -> vector<8x256xf32>
    %c0_3 = arith.constant 0 : index
    %c0_4 = arith.constant 0 : index
    %4 = vector.load %arg3[%c0_3, %c0_4] : memref<1x256xf32, #tpu.memory_space<vmem>>, vector<1x256xf32>
    %5 = vector.broadcast %4 : vector<1x256xf32> to vector<8x256xf32>
    %6 = arith.addf %3, %5 : vector<8x256xf32>
    %cst_5 = arith.constant 0.000000e+00 : f32
    %7 = vector.broadcast %cst_5 : f32 to vector<8x256xf32>
    %8 = arith.maximumf %6, %7 : vector<8x256xf32>
    %9 = arith.truncf %8 : vector<8x256xf32> to vector<8x256xbf16>
    %c0_6 = arith.constant 0 : index
    %c0_7 = arith.constant 0 : index
    %10 = vector.load %arg4[%c0_6, %c0_7] : memref<256x128xbf16, #tpu.memory_space<vmem>>, vector<256x128xbf16>
    %cst_8 = arith.constant dense<0.000000e+00> : vector<8x128xf32>
    %11 = tpu.matmul %9, %10, %cst_8 {dimension_numbers = #tpu.dot_dimension_numbers<[1], [0], [0], [1], [0, 0, 1, 1], [], []>} : vector<8x256xbf16>, vector<256x128xbf16>, vector<8x128xf32> -> vector<8x128xf32>
    %c0_9 = arith.constant 0 : index
    %c0_10 = arith.constant 0 : index
    %12 = vector.load %arg5[%c0_9, %c0_10] : memref<1x128xf32, #tpu.memory_space<vmem>>, vector<1x128xf32>
    %13 = vector.broadcast %12 : vector<1x128xf32> to vector<8x128xf32>
    %14 = arith.addf %11, %13 : vector<8x128xf32>
    %cst_11 = arith.constant 0.000000e+00 : f32
    %15 = vector.broadcast %cst_11 : f32 to vector<8x128xf32>
    %16 = arith.maximumf %14, %15 : vector<8x128xf32>
    %17 = arith.truncf %16 : vector<8x128xf32> to vector<8x128xbf16>
    %c0_12 = arith.constant 0 : index
    %c0_13 = arith.constant 0 : index
    %18 = vector.load %arg6[%c0_12, %c0_13] : memref<128x64xbf16, #tpu.memory_space<vmem>>, vector<128x64xbf16>
    %cst_14 = arith.constant dense<0.000000e+00> : vector<8x64xf32>
    %19 = tpu.matmul %17, %18, %cst_14 {dimension_numbers = #tpu.dot_dimension_numbers<[1], [0], [0], [1], [0, 0, 1, 1], [], []>} : vector<8x128xbf16>, vector<128x64xbf16>, vector<8x64xf32> -> vector<8x64xf32>
    %c0_15 = arith.constant 0 : index
    %c0_16 = arith.constant 0 : index
    %20 = vector.load %arg7[%c0_15, %c0_16] : memref<1x64xf32, #tpu.memory_space<vmem>>, vector<1x64xf32>
    %21 = vector.broadcast %20 : vector<1x64xf32> to vector<8x64xf32>
    %22 = arith.addf %19, %21 : vector<8x64xf32>
    %cst_17 = arith.constant 0.000000e+00 : f32
    %23 = vector.broadcast %cst_17 : f32 to vector<8x64xf32>
    %24 = arith.maximumf %22, %23 : vector<8x64xf32>
    %c0_18 = arith.constant 0 : index
    %c0_19 = arith.constant 0 : index
    %25 = vector.load %arg8[%c0_18, %c0_19] : memref<8x64xf32, #tpu.memory_space<vmem>>, vector<8x64xf32>
    %cst_20 = arith.constant dense<0.000000e+00> : vector<8x8xf32>
    %26 = tpu.matmul %25, %24, %cst_20 {dimension_numbers = #tpu.dot_dimension_numbers<[1], [1], [0], [0], [0, 0, 1, 0], [], []>} : vector<8x64xf32>, vector<8x64xf32>, vector<8x8xf32> -> vector<8x8xf32>
    %27 = vector.extract_strided_slice %26 {offsets = [0, 0], sizes = [1, 8], strides = [1, 1]} : vector<8x8xf32> to vector<1x8xf32>
    %c0_21 = arith.constant 0 : index
    %c0_22 = arith.constant 0 : index
    %28 = vector.load %arg9[%c0_21, %c0_22] : memref<1x1xf32, #tpu.memory_space<vmem>>, vector<1x1xf32>
    %29 = vector.broadcast %28 : vector<1x1xf32> to vector<1x8xf32>
    %30 = arith.addf %27, %29 : vector<1x8xf32>
    %cst_23 = arith.constant 0.000000e+00 : f32
    %31 = vector.broadcast %cst_23 : f32 to vector<1x8xf32>
    %32 = arith.subf %31, %30 : vector<1x8xf32>
    %33 = math.exp %32 : vector<1x8xf32>
    %cst_24 = arith.constant 1.000000e+00 : f32
    %34 = vector.broadcast %cst_24 : f32 to vector<1x8xf32>
    %35 = arith.addf %34, %33 : vector<1x8xf32>
    %cst_25 = arith.constant 1.000000e+00 : f32
    %36 = vector.broadcast %cst_25 : f32 to vector<1x8xf32>
    %37 = arith.divf %36, %35 : vector<1x8xf32>
    %c0_26 = arith.constant 0 : index
    %c0_27 = arith.constant 0 : index
    %38 = vector.load %arg10[%c0_26, %c0_27] : memref<1x8xf32, #tpu.memory_space<vmem>>, vector<1x8xf32>
    tpu.vector_store %arg10[%c0_26, %c0_27], %37 {strides = array<i32>} : memref<1x8xf32, #tpu.memory_space<vmem>>, vector<1x8xf32>,
    return
  }
  func.func @transform_0(%arg0: i32) -> (i32, i32) {
    %c0_i32 = arith.constant 0 : i32
    %c0_i32_0 = arith.constant 0 : i32
    return %arg0, %c0_i32 : i32, i32
  }
  func.func @transform_1(%arg0: i32) -> (i32, i32) {
    %c0_i32 = arith.constant 0 : i32
    %c0_i32_0 = arith.constant 0 : i32
    %c0_i32_1 = arith.constant 0 : i32
    return %c0_i32, %c0_i32_0 : i32, i32
  }
  func.func @transform_2(%arg0: i32) -> (i32, i32) {
    %c0_i32 = arith.constant 0 : i32
    %c0_i32_0 = arith.constant 0 : i32
    %c0_i32_1 = arith.constant 0 : i32
    return %c0_i32, %c0_i32_0 : i32, i32
  }
  func.func @transform_3(%arg0: i32) -> (i32, i32) {
    %c0_i32 = arith.constant 0 : i32
    %c0_i32_0 = arith.constant 0 : i32
    %c0_i32_1 = arith.constant 0 : i32
    return %c0_i32, %c0_i32_0 : i32, i32
  }
  func.func @transform_4(%arg0: i32) -> (i32, i32) {
    %c0_i32 = arith.constant 0 : i32
    %c0_i32_0 = arith.constant 0 : i32
    %c0_i32_1 = arith.constant 0 : i32
    return %c0_i32, %c0_i32_0 : i32, i32
  }
  func.func @transform_5(%arg0: i32) -> (i32, i32) {
    %c0_i32 = arith.constant 0 : i32
    %c0_i32_0 = arith.constant 0 : i32
    %c0_i32_1 = arith.constant 0 : i32
    return %c0_i32, %c0_i32_0 : i32, i32
  }
  func.func @transform_6(%arg0: i32) -> (i32, i32) {
    %c0_i32 = arith.constant 0 : i32
    %c0_i32_0 = arith.constant 0 : i32
    %c0_i32_1 = arith.constant 0 : i32
    return %c0_i32, %c0_i32_0 : i32, i32
  }
  func.func @transform_7(%arg0: i32) -> (i32, i32) {
    %c0_i32 = arith.constant 0 : i32
    %c0_i32_0 = arith.constant 0 : i32
    %c0_i32_1 = arith.constant 0 : i32
    return %c0_i32, %c0_i32_0 : i32, i32
  }
  func.func @transform_8(%arg0: i32) -> (i32, i32) {
    %c0_i32 = arith.constant 0 : i32
    %c0_i32_0 = arith.constant 0 : i32
    %c0_i32_1 = arith.constant 0 : i32
    return %c0_i32, %c0_i32_0 : i32, i32
  }
  func.func @transform_9(%arg0: i32) -> (i32, i32) {
    %c0_i32 = arith.constant 0 : i32
    %c0_i32_0 = arith.constant 0 : i32
    return %c0_i32, %arg0 : i32, i32
  }
}

</mosaic_0001>

<llo_original>
// kernel: saplma_forward.1
$region0: #{saplma_forward.1}
  #allocation0 [shape = 'u32[]', space=smem, size = 0x4, offset = 0x4, fixed_abs, tag = 'smem constant byte address 0x4 - core index']
  #allocation1 [shape = 'u32[144,128]{1,0:T(1,128)}', space=vmem, size = 0x12000, scoped, tag = 'internal scratch']
  #allocation2 [shape = 'f32[1,1]{1,0:T(1,128)S(1)}', space=vmem, size = 0x200, scoped, tag = 'scoped memory for saplma_forward.1']
  %s0 = inlined_call_operand.vmem [shape: f32[8,32], index: 0, kind: input, shape index: {}]
  %s1 = inlined_call_operand.vmem [shape: bf16[32,256], index: 1, kind: input, shape index: {}]
  %s2 = inlined_call_operand.vmem [shape: f32[1,256], index: 2, kind: input, shape index: {}]
  %s3 = inlined_call_operand.vmem [shape: bf16[256,128], index: 3, kind: input, shape index: {}]
  %s4 = inlined_call_operand.vmem [shape: f32[1,128], index: 4, kind: input, shape index: {}]
  %s5 = inlined_call_operand.vmem [shape: bf16[128,64], index: 5, kind: input, shape index: {}]
  %s6 = inlined_call_operand.vmem [shape: f32[1,64], index: 6, kind: input, shape index: {}]
  %s7 = inlined_call_operand.vmem [shape: f32[8,64], index: 7, kind: input, shape index: {}]
  %s8 = inlined_call_operand.<no memory space> [shape: f32[1,1], index: 8, kind: input, shape index: {}]
  %s9 = inlined_call_operand.hbm [shape: f32[1,8], index: 9, kind: output, shape index: {}]
  %s10 = sld [smem:[#allocation0]]
  $region46: #{saplma_forward.1} parent=0
    _
  %s12 = ssub.s32 1, %s10
  %s13 = scalar_select 0, %s12, %s10
  %v14 = vstv %s8
  %15 = vst [vmem:[#allocation2] sm:$0x1] %v14
  $region1: #{saplma_forward.1} parent=0
    #allocation3 [shape = 'u8[512]{0}', space=vmem, size = 0x400, scoped, tag = 'output window, operand 0, single buffered']
    #allocation4 [shape = 's32[1]{0}', space=sflag, size = 0x4, scoped, tag = 'scoped memory for saplma_forward.1']
    %16 = vsyncpa [#allocation4], 0
    // Predicated region
    $region2: #{saplma_forward.1} parent=1 // pred_check
      _
    $region3: #{saplma_forward.1} parent=1 // pred_check_branch
      %18 = sbr.rel (0) target = $region5
    $region4: #{saplma_forward.1} parent=1 // pred_region
      _
    $region5: #{saplma_forward.1} parent=1 // pred_fallthru
      _
    // Predicated region
    $region6: #{saplma_forward.1} parent=1 // pred_check
      _
    $region7: #{saplma_forward.1} parent=1 // pred_check_branch
      %20 = sbr.rel (0) target = $region9
    $region8: #{saplma_forward.1} parent=1 // pred_region
      _
    $region9: #{saplma_forward.1} parent=1 // pred_fallthru
      _
    // Predicated region
    $region10: #{saplma_forward.1} parent=1 // pred_check
      _
    $region11: #{saplma_forward.1} parent=1 // pred_check_branch
      %22 = sbr.rel (0) target = $region13
    $region12: #{saplma_forward.1} parent=1 // pred_region
      _
    $region13: #{saplma_forward.1} parent=1 // pred_fallthru
      _
    // Predicated region
    $region14: #{saplma_forward.1} parent=1 // pred_check
      _
    $region15: #{saplma_forward.1} parent=1 // pred_check_branch
      %24 = sbr.rel (0) target = $region17
    $region16: #{saplma_forward.1} parent=1 // pred_region
      _
    $region17: #{saplma_forward.1} parent=1 // pred_fallthru
      _
    // Predicated region
    $region18: #{saplma_forward.1} parent=1 // pred_check
      _
    $region19: #{saplma_forward.1} parent=1 // pred_check_branch
      %26 = sbr.rel (0) target = $region21
    $region20: #{saplma_forward.1} parent=1 // pred_region
      _
    $region21: #{saplma_forward.1} parent=1 // pred_fallthru
      _
    // Predicated region
    $region22: #{saplma_forward.1} parent=1 // pred_check
      _
    $region23: #{saplma_forward.1} parent=1 // pred_check_branch
      %28 = sbr.rel (0) target = $region25
    $region24: #{saplma_forward.1} parent=1 // pred_region
      _
    $region25: #{saplma_forward.1} parent=1 // pred_fallthru
      _
    // Predicated region
    $region26: #{saplma_forward.1} parent=1 // pred_check
      _
    $region27: #{saplma_forward.1} parent=1 // pred_check_branch
      %30 = sbr.rel (0) target = $region29
    $region28: #{saplma_forward.1} parent=1 // pred_region
      _
    $region29: #{saplma_forward.1} parent=1 // pred_fallthru
      _
    // Predicated region
    $region30: #{saplma_forward.1} parent=1 // pred_check
      _
    $region31: #{saplma_forward.1} parent=1 // pred_check_branch
      %32 = sbr.rel (0) target = $region33
    $region32: #{saplma_forward.1} parent=1 // pred_region
      _
    $region33: #{saplma_forward.1} parent=1 // pred_fallthru
      _
    // Predicated region
    $region34: #{saplma_forward.1} parent=1 // pred_check
      _
    $region35: #{saplma_forward.1} parent=1 // pred_check_branch
      %34 = sbr.rel (0) target = $region37
    $region36: #{saplma_forward.1} parent=1 // pred_region
      _
    $region37: #{saplma_forward.1} parent=1 // pred_fallthru
      _
    %v36 = vld [vmem:[%s0] sm:$0xff]
    %v37 = vpack.c.bf16 %v36, %v36
    %v38 = vld [vmem:[%s1] sm:$0xff]
    %v39 = vld [vmem:[%s1 + $0x8] sm:$0xff]
    %v40 = vld [vmem:[%s1 + $0x10] sm:$0xff]
    %v41 = vld [vmem:[%s1 + $0x18] sm:$0xff]
    %v42 = vld [vmem:[%s2] sm:$0x3]
    %v44 = vlaneseq
    %v45 = vshrl.u32 %v44, 7
    %v46 = vsub.s32 0, %v45
    %v47 = vrot.slane %v42, %v46
    %v48 = vlaneseq
    %v49 = vshrl.u32 %v48, 7
    %v50 = vsub.s32 1, %v49
    %v51 = vrot.slane %v42, %v50
    %v58 = vunpack.c.l.b16 %v38
    %v59 = vunpack.c.h.b16 %v38
    %v60 = vunpack.c.l.b16 %v39
    %v61 = vunpack.c.h.b16 %v39
    %v62 = vunpack.c.l.b16 %v40
    %v63 = vunpack.c.h.b16 %v40
    %v64 = vunpack.c.l.b16 %v41
    %v65 = vunpack.c.h.b16 %v41
    %v66 = vpack.c.b16 %v60, %v58
    %v67 = vpack.c.b16 %v61, %v59
    %v68 = vpack.c.b16 %v64, %v62
    %v69 = vpack.c.b16 %v65, %v63
    %vm74 = vcmask 261120
    %v76 = vsel %vm74, %v37, 0
    %78 = vmatprep.subr.bf16.mxu0 %v67
    %79 = vmatpush1.bf16.msra.mxu0 %v66
    %80 = vmatprep.subr.bf16.mxu0 %v69
    %81 = vmatpush1.bf16.msra.mxu0 %v68
    %82 = vmatprep.subr.bf16.mxu0 0
    %83 = vmatpush1.bf16.msra.mxu0 0
    %84 = vmatprep.subr.bf16.mxu0 0
    %85 = vmatpush1.bf16.msra.mxu0 0
    %86 = vmatprep.subr.bf16.mxu0 0
    %87 = vmatpush1.bf16.msra.mxu0 0
    %88 = vmatprep.subr.bf16.mxu0 0
    %89 = vmatpush1.bf16.msra.mxu0 0
    %90 = vmatprep.subr.bf16.mxu0 0
    %91 = vmatpush1.bf16.msra.mxu0 0
    %92 = vmatprep.subr.bf16.mxu0 0
    %93 = vmatpush1.bf16.msra.mxu0 0
    %94 = vmatprep.subr.bf16.mxu0 0
    %95 = vmatpush1.bf16.msra.mxu0 0
    %96 = vmatprep.subr.bf16.mxu0 0
    %97 = vmatpush1.bf16.msra.mxu0 0
    %98 = vmatprep.subr.bf16.mxu0 0
    %99 = vmatpush1.bf16.msra.mxu0 0
    %100 = vmatprep.subr.bf16.mxu0 0
    %101 = vmatpush1.bf16.msra.mxu0 0
    %102 = vmatprep.subr.bf16.mxu0 0
    %103 = vmatpush1.bf16.msra.mxu0 0
    %104 = vmatprep.subr.bf16.mxu0 0
    %105 = vmatpush1.bf16.msra.mxu0 0
    %106 = vmatprep.subr.bf16.mxu0 0
    %107 = vmatpush1.bf16.msra.mxu0 0
    %108 = vmatprep.subr.bf16.mxu0 0
    %109 = vmatpush1.bf16.msra.mxu0 0
    %110 = vmatprep.mubr.bf16.mxu0 0
    %111 = vmatmul.mubr.bf16.gmra.mrb[0].mxu0 %v76
    %v112 = vpop.f32.mrb[0].mxu0
    %v113 = vadd.f32 %v47, %v112
    %v114 = vpop.f32.mrb[0].mxu0
    %v115 = vadd.f32 %v51, %v114
    %v116 = vpop.f32.mrb[0].mxu0
    %v117 = vpop.f32.mrb[0].mxu0
    %118 = vdwg.mxu0
    %v119 = vmax.f32 %v113, 0.0
    %v120 = vmax.f32 %v115, 0.0
    %v121 = vpack.c.bf16 %v119, %v119
    %v122 = vpack.c.bf16 %v120, %v120
    %v123 = vld [vmem:[%s3] sm:$0xf]
    %v124 = vld [vmem:[%s3 + $0x4] sm:$0xf]
    %v125 = vld [vmem:[%s3 + $0x8] sm:$0xf]
    %v126 = vld [vmem:[%s3 + $0xc] sm:$0xf]
    %v127 = vld [vmem:[%s3 + $0x10] sm:$0xf]
    %v128 = vld [vmem:[%s3 + $0x14] sm:$0xf]
    %v129 = vld [vmem:[%s3 + $0x18] sm:$0xf]
    %v130 = vld [vmem:[%s3 + $0x1c] sm:$0xf]
    %v131 = vld [vmem:[%s3 + $0x20] sm:$0xf]
    %v132 = vld [vmem:[%s3 + $0x24] sm:$0xf]
    %v133 = vld [vmem:[%s3 + $0x28] sm:$0xf]
    %v134 = vld [vmem:[%s3 + $0x2c] sm:$0xf]
    %v135 = vld [vmem:[%s3 + $0x30] sm:$0xf]
    %v136 = vld [vmem:[%s3 + $0x34] sm:$0xf]
    %v137 = vld [vmem:[%s3 + $0x38] sm:$0xf]
    %v138 = vld [vmem:[%s3 + $0x3c] sm:$0xf]
    %v139 = vld [vmem:[%s3 + $0x40] sm:$0xf]
    %v140 = vld [vmem:[%s3 + $0x44] sm:$0xf]
    %v141 = vld [vmem:[%s3 + $0x48] sm:$0xf]
    %v142 = vld [vmem:[%s3 + $0x4c] sm:$0xf]
    %v143 = vld [vmem:[%s3 + $0x50] sm:$0xf]
    %v144 = vld [vmem:[%s3 + $0x54] sm:$0xf]
    %v145 = vld [vmem:[%s3 + $0x58] sm:$0xf]
    %v146 = vld [vmem:[%s3 + $0x5c] sm:$0xf]
    %v147 = vld [vmem:[%s3 + $0x60] sm:$0xf]
    %v148 = vld [vmem:[%s3 + $0x64] sm:$0xf]
    %v149 = vld [vmem:[%s3 + $0x68] sm:$0xf]
    %v150 = vld [vmem:[%s3 + $0x6c] sm:$0xf]
    %v151 = vld [vmem:[%s3 + $0x70] sm:$0xf]
    %v152 = vld [vmem:[%s3 + $0x74] sm:$0xf]
    %v153 = vld [vmem:[%s3 + $0x78] sm:$0xf]
    %v154 = vld [vmem:[%s3 + $0x7c] sm:$0xf]
    %v155 = vld [vmem:[%s4] sm:$0x1]
    %v157 = vlaneseq
    %v158 = vshrl.u32 %v157, 7
    %v159 = vsub.s32 0, %v158
    %v160 = vrot.slane %v155, %v159
    %v194 = vunpack.c.l.b16 %v123
    %v195 = vunpack.c.l.b16 %v124
    %v196 = vunpack.c.l.b16 %v125
    %v197 = vunpack.c.l.b16 %v126
    %v198 = vunpack.c.l.b16 %v127
    %v199 = vunpack.c.l.b16 %v128
    %v200 = vunpack.c.l.b16 %v129
    %v201 = vunpack.c.l.b16 %v130
    %v202 = vunpack.c.l.b16 %v131
    %v203 = vunpack.c.l.b16 %v132
    %v204 = vunpack.c.l.b16 %v133
    %v205 = vunpack.c.l.b16 %v134
    %v206 = vunpack.c.l.b16 %v135
    %v207 = vunpack.c.l.b16 %v136
    %v208 = vunpack.c.l.b16 %v137
    %v209 = vunpack.c.l.b16 %v138
    %v210 = vunpack.c.l.b16 %v139
    %v211 = vunpack.c.l.b16 %v140
    %v212 = vunpack.c.l.b16 %v141
    %v213 = vunpack.c.l.b16 %v142
    %v214 = vunpack.c.l.b16 %v143
    %v215 = vunpack.c.l.b16 %v144
    %v216 = vunpack.c.l.b16 %v145
    %v217 = vunpack.c.l.b16 %v146
    %v218 = vunpack.c.l.b16 %v147
    %v219 = vunpack.c.l.b16 %v148
    %v220 = vunpack.c.l.b16 %v149
    %v221 = vunpack.c.l.b16 %v150
    %v222 = vunpack.c.l.b16 %v151
    %v223 = vunpack.c.l.b16 %v152
    %v224 = vunpack.c.l.b16 %v153
    %v225 = vunpack.c.l.b16 %v154
    %v226 = vpack.c.b16 %v195, %v194
    %v227 = vpack.c.b16 %v197, %v196
    %v228 = vpack.c.b16 %v199, %v198
    %v229 = vpack.c.b16 %v201, %v200
    %v230 = vpack.c.b16 %v203, %v202
    %v231 = vpack.c.b16 %v205, %v204
    %v232 = vpack.c.b16 %v207, %v206
    %v233 = vpack.c.b16 %v209, %v208
    %v234 = vpack.c.b16 %v211, %v210
    %v235 = vpack.c.b16 %v213, %v212
    %v236 = vpack.c.b16 %v215, %v214
    %v237 = vpack.c.b16 %v217, %v216
    %v238 = vpack.c.b16 %v219, %v218
    %v239 = vpack.c.b16 %v221, %v220
    %v240 = vpack.c.b16 %v223, %v222
    %v241 = vpack.c.b16 %v225, %v224
    %258 = vmatprep.subr.bf16.mxu0 0
    %259 = vmatpush1.bf16.msra.mxu0 %v226
    %260 = vmatprep.subr.bf16.mxu0 0
    %261 = vmatpush1.bf16.msra.mxu0 %v227
    %262 = vmatprep.subr.bf16.mxu0 0
    %263 = vmatpush1.bf16.msra.mxu0 %v228
    %264 = vmatprep.subr.bf16.mxu0 0
    %265 = vmatpush1.bf16.msra.mxu0 %v229
    %266 = vmatprep.subr.bf16.mxu0 0
    %267 = vmatpush1.bf16.msra.mxu0 %v230
    %268 = vmatprep.subr.bf16.mxu0 0
    %269 = vmatpush1.bf16.msra.mxu0 %v231
    %270 = vmatprep.subr.bf16.mxu0 0
    %271 = vmatpush1.bf16.msra.mxu0 %v232
    %272 = vmatprep.subr.bf16.mxu0 0
    %273 = vmatpush1.bf16.msra.mxu0 %v233
    %274 = vmatprep.subr.bf16.mxu0 0
    %275 = vmatpush1.bf16.msra.mxu0 %v234
    %276 = vmatprep.subr.bf16.mxu0 0
    %277 = vmatpush1.bf16.msra.mxu0 %v235
    %278 = vmatprep.subr.bf16.mxu0 0
    %279 = vmatpush1.bf16.msra.mxu0 %v236
    %280 = vmatprep.subr.bf16.mxu0 0
    %281 = vmatpush1.bf16.msra.mxu0 %v237
    %282 = vmatprep.subr.bf16.mxu0 0
    %283 = vmatpush1.bf16.msra.mxu0 %v238
    %284 = vmatprep.subr.bf16.mxu0 0
    %285 = vmatpush1.bf16.msra.mxu0 %v239
    %286 = vmatprep.subr.bf16.mxu0 0
    %287 = vmatpush1.bf16.msra.mxu0 %v240
    %288 = vmatprep.subr.bf16.mxu0 0
    %289 = vmatpush1.bf16.msra.mxu0 %v241
    %290 = vmatprep.mubr.bf16.mxu0 %v122
    %291 = vmatmul.mubr.bf16.gmra.mrb[0].mxu0 %v121
    %v292 = vpop.f32.mrb[0].mxu0
    %v293 = vadd.f32 %v160, %v292
    %v294 = vpop.f32.mrb[0].mxu0
    %v295 = vpop.f32.mrb[0].mxu0
    %v296 = vpop.f32.mrb[0].mxu0
    %297 = vdwg.mxu0
    %v298 = vmax.f32 %v293, 0.0
    %v299 = vpack.c.bf16 %v298, %v298
    %v300 = vld [vmem:[%s5] sm:$0xf]
    %v301 = vld [vmem:[%s5 + $0x4] sm:$0xf]
    %v302 = vld [vmem:[%s5 + $0x8] sm:$0xf]
    %v303 = vld [vmem:[%s5 + $0xc] sm:$0xf]
    %v304 = vld [vmem:[%s5 + $0x10] sm:$0xf]
    %v305 = vld [vmem:[%s5 + $0x14] sm:$0xf]
    %v306 = vld [vmem:[%s5 + $0x18] sm:$0xf]
    %v307 = vld [vmem:[%s5 + $0x1c] sm:$0xf]
    %v308 = vld [vmem:[%s5 + $0x20] sm:$0xf]
    %v309 = vld [vmem:[%s5 + $0x24] sm:$0xf]
    %v310 = vld [vmem:[%s5 + $0x28] sm:$0xf]
    %v311 = vld [vmem:[%s5 + $0x2c] sm:$0xf]
    %v312 = vld [vmem:[%s5 + $0x30] sm:$0xf]
    %v313 = vld [vmem:[%s5 + $0x34] sm:$0xf]
    %v314 = vld [vmem:[%s5 + $0x38] sm:$0xf]
    %v315 = vld [vmem:[%s5 + $0x3c] sm:$0xf]
    %v316 = vld [vmem:[%s6] sm:$0x1]
    %v318 = vlaneseq
    %v319 = vshrl.u32 %v318, 7
    %v320 = vsub.s32 0, %v319
    %v321 = vrot.slane %v316, %v320
    %v339 = vunpack.c.l.b16 %v300
    %v340 = vunpack.c.l.b16 %v301
    %v341 = vunpack.c.l.b16 %v302
    %v342 = vunpack.c.l.b16 %v303
    %v343 = vunpack.c.l.b16 %v304
    %v344 = vunpack.c.l.b16 %v305
    %v345 = vunpack.c.l.b16 %v306
    %v346 = vunpack.c.l.b16 %v307
    %v347 = vunpack.c.l.b16 %v308
    %v348 = vunpack.c.l.b16 %v309
    %v349 = vunpack.c.l.b16 %v310
    %v350 = vunpack.c.l.b16 %v311
    %v351 = vunpack.c.l.b16 %v312
    %v352 = vunpack.c.l.b16 %v313
    %v353 = vunpack.c.l.b16 %v314
    %v354 = vunpack.c.l.b16 %v315
    %v355 = vpack.c.b16 %v340, %v339
    %v356 = vpack.c.b16 %v342, %v341
    %v357 = vpack.c.b16 %v344, %v343
    %v358 = vpack.c.b16 %v346, %v345
    %v359 = vpack.c.b16 %v348, %v347
    %v360 = vpack.c.b16 %v350, %v349
    %v361 = vpack.c.b16 %v352, %v351
    %v362 = vpack.c.b16 %v354, %v353
    %371 = vmatprep.subr.bf16.mxu0 0
    %372 = vmatpush1.bf16.msra.mxu0 %v355
    %373 = vmatprep.subr.bf16.mxu0 0
    %374 = vmatpush1.bf16.msra.mxu0 %v356
    %375 = vmatprep.subr.bf16.mxu0 0
    %376 = vmatpush1.bf16.msra.mxu0 %v357
    %377 = vmatprep.subr.bf16.mxu0 0
    %378 = vmatpush1.bf16.msra.mxu0 %v358
    %379 = vmatprep.subr.bf16.mxu0 0
    %380 = vmatpush1.bf16.msra.mxu0 %v359
    %381 = vmatprep.subr.bf16.mxu0 0
    %382 = vmatpush1.bf16.msra.mxu0 %v360
    %383 = vmatprep.subr.bf16.mxu0 0
    %384 = vmatpush1.bf16.msra.mxu0 %v361
    %385 = vmatprep.subr.bf16.mxu0 0
    %386 = vmatpush1.bf16.msra.mxu0 %v362
    %387 = vmatprep.subr.bf16.mxu0 0
    %388 = vmatpush1.bf16.msra.mxu0 0
    %389 = vmatprep.subr.bf16.mxu0 0
    %390 = vmatpush1.bf16.msra.mxu0 0
    %391 = vmatprep.subr.bf16.mxu0 0
    %392 = vmatpush1.bf16.msra.mxu0 0
    %393 = vmatprep.subr.bf16.mxu0 0
    %394 = vmatpush1.bf16.msra.mxu0 0
    %395 = vmatprep.subr.bf16.mxu0 0
    %396 = vmatpush1.bf16.msra.mxu0 0
    %397 = vmatprep.subr.bf16.mxu0 0
    %398 = vmatpush1.bf16.msra.mxu0 0
    %399 = vmatprep.subr.bf16.mxu0 0
    %400 = vmatpush1.bf16.msra.mxu0 0
    %401 = vmatprep.subr.bf16.mxu0 0
    %402 = vmatpush1.bf16.msra.mxu0 0
    %403 = vmatprep.mubr.bf16.mxu0 0
    %404 = vmatmul.mubr.bf16.gmra.mrb[0].mxu0 %v299
    %v405 = vpop.f32.mrb[0].mxu0
    %v406 = vadd.f32 %v321, %v405
    %v407 = vpop.f32.mrb[0].mxu0
    %v408 = vpop.f32.mrb[0].mxu0
    %v409 = vpop.f32.mrb[0].mxu0
    %410 = vdwg.mxu0
    %v411 = vmax.f32 %v406, 0.0
    %v412 = vld [vmem:[%s7] sm:$0xff]
    %vm413 = vcmask 523264
    %v415 = vsel %vm413, %v412, 0
    %v418 = vsel %vm413, %v411, 0
    %420 = vmatprep.subr.mxu0 0.0
    %421 = vmatpush1.xpose.msra.mxu0 %v418
    %422 = vmatprep.subr.mxu0 0.0
    %423 = vmatpush1.xpose.msra.mxu0 0.0
    %424 = vmatprep.subr.mxu0 0.0
    %425 = vmatpush1.xpose.msra.mxu0 0.0
    %426 = vmatprep.subr.mxu0 0.0
    %427 = vmatpush1.xpose.msra.mxu0 0.0
    %428 = vmatprep.subr.mxu0 0.0
    %429 = vmatpush1.xpose.msra.mxu0 0.0
    %430 = vmatprep.subr.mxu0 0.0
    %431 = vmatpush1.xpose.msra.mxu0 0.0
    %432 = vmatprep.subr.mxu0 0.0
    %433 = vmatpush1.xpose.msra.mxu0 0.0
    %434 = vmatprep.subr.mxu0 0.0
    %435 = vmatpush1.xpose.msra.mxu0 0.0
    %436 = vmatprep.subr.mxu0 0.0
    %437 = vmatpush1.xpose.msra.mxu0 0.0
    %438 = vmatprep.subr.mxu0 0.0
    %439 = vmatpush1.xpose.msra.mxu0 0.0
    %440 = vmatprep.subr.mxu0 0.0
    %441 = vmatpush1.xpose.msra.mxu0 0.0
    %442 = vmatprep.subr.mxu0 0.0
    %443 = vmatpush1.xpose.msra.mxu0 0.0
    %444 = vmatprep.subr.mxu0 0.0
    %445 = vmatpush1.xpose.msra.mxu0 0.0
    %446 = vmatprep.subr.mxu0 0.0
    %447 = vmatpush1.xpose.msra.mxu0 0.0
    %448 = vmatprep.subr.mxu0 0.0
    %449 = vmatpush1.xpose.msra.mxu0 0.0
    %450 = vmatprep.subr.mxu0 0.0
    %451 = vmatpush1.xpose.msra.mxu0 0.0
    %452 = vmatprep.subr.mxu0 0.0
    %453 = vmatpush1.xpose.msra.mxu0 0.0
    %454 = vmatprep.subr.mxu0 0.0
    %455 = vmatpush1.xpose.msra.mxu0 0.0
    %456 = vmatprep.subr.mxu0 0.0
    %457 = vmatpush1.xpose.msra.mxu0 0.0
    %458 = vmatprep.subr.mxu0 0.0
    %459 = vmatpush1.xpose.msra.mxu0 0.0
    %460 = vmatprep.subr.mxu0 0.0
    %461 = vmatpush1.xpose.msra.mxu0 0.0
    %462 = vmatprep.subr.mxu0 0.0
    %463 = vmatpush1.xpose.msra.mxu0 0.0
    %464 = vmatprep.subr.mxu0 0.0
    %465 = vmatpush1.xpose.msra.mxu0 0.0
    %466 = vmatprep.subr.mxu0 0.0
    %467 = vmatpush1.xpose.msra.mxu0 0.0
    %468 = vmatprep.subr.mxu0 0.0
    %469 = vmatpush1.xpose.msra.mxu0 0.0
    %470 = vmatprep.subr.mxu0 0.0
    %471 = vmatpush1.xpose.msra.mxu0 0.0
    %472 = vmatprep.subr.mxu0 0.0
    %473 = vmatpush1.xpose.msra.mxu0 0.0
    %474 = vmatprep.subr.mxu0 0.0
    %475 = vmatpush1.xpose.msra.mxu0 0.0
    %476 = vmatprep.subr.mxu0 0.0
    %477 = vmatpush1.xpose.msra.mxu0 0.0
    %478 = vmatprep.subr.mxu0 0.0
    %479 = vmatpush1.xpose.msra.mxu0 0.0
    %480 = vmatprep.subr.mxu0 0.0
    %481 = vmatpush1.xpose.msra.mxu0 0.0
    %482 = vmatprep.subr.mxu0 0.0
    %483 = vmatpush1.xpose.msra.mxu0 0.0
    %484 = vmatprep.mubr.f32.mxu0 0.0
    %485 = vmatmul.mubr.f32.gmra.mrb[0].mxu0 %v415
    %v486 = vpop.f32.mrb[0].mxu0
    %v487 = vadd.f32 0.0, %v486
    %v488 = vpop.f32.mrb[0].mxu0
    %489 = vdwg.mxu0
    %v490 = vld [vmem:[#allocation2] sm:$0x1]
    %492 = vset.pattern.permute.xlu0 0
    %493 = vperm.xlu0 %492, %v490
    %v494 = vpop.permute.xlu0 %493
    %v496 = vlaneseq
    %v497 = vshrl.u32 %v496, 7
    %v498 = vsub.s32 0, %v497
    %v499 = vrot.slane %v494, %v498
    %v500 = vadd.f32 %v487, %v499
    %v501 = vsub.f32 0.0, %v500
    %v502 = vmul.f32 %v501, 1.442695
    %v503 = vpow.pop %v502
    %v504 = vadd.f32 %v503, 1.0
    %v505 = vrcp.pop %v504
    %v506 = vmul.f32 1.0, %v505
    %vm507 = vcmask 57344
    %508 = vst.msk [vmem:[#allocation3] sm:$0x1] %vm507, %v506
    // Predicated region
    $region38: #{saplma_forward.1} parent=1 // pred_check
      _
    $region39: #{saplma_forward.1} parent=1 // pred_check_branch
      %510 = sbr.rel (0) target = $region41
    $region40: #{saplma_forward.1} parent=1 // pred_region
      %s512 = ssub.s32 16, 16
      %513 = vsyncadd [#allocation4], %s512
      %s515 = sshll.u32 [#allocation3], 4
      %s516 = int_to_ptr.vmem [resolvable:$true] %s515
      %518 = dma.vmem_to_hbm [thread:$0]  %s516, 16, %s9, [#allocation4]
    $region41: #{saplma_forward.1} parent=1 // pred_fallthru
      _
    // Predicated region
    $region42: #{saplma_forward.1} parent=1 // pred_check
      _
    $region43: #{saplma_forward.1} parent=1 // pred_check_branch
      %520 = sbr.rel (0) target = $region45
    $region44: #{saplma_forward.1} parent=1 // pred_region
      %521 = dma.done [#allocation4], 16
    $region45: #{saplma_forward.1} parent=1 // pred_fallthru
      _
    %522 = vsyncpa [#allocation4], 1

</llo_original>
